<compile_context>
chip_gen: v5e
topology: v5e:2x2
jax: 0.10.0
libtpu: 0.0.40
codegen_flags: <defaults>
</compile_context>

<pallas_src>
import functools
import math

import jax
import jax.numpy as jnp
from jax import lax
from jax.experimental import pallas as pl
from jax.experimental.pallas import tpu as pltpu


_MASK_FILL = -1e30  # exp(fill - row_max) underflows to exactly 0, like -inf


def _sdpa_body(q_ref, k_ref, v_ref, mask_ref, out_ref, attn_ref, inv_temp):
    # Fold 1/temperature into the (TQ, D) q tile (cheaper than scaling (TQ, Lk)).
    q = q_ref[0] * jnp.asarray(inv_temp, q_ref.dtype)        # (TQ, D)
    k = k_ref[0]                                             # (Lk, D)
    v = v_ref[0]                                             # (Lk, Dv)

    # scores = (q / T) @ k^T : contract last dims of both operands directly
    # on the MXU (no transpose / re-layout of k).
    scores = lax.dot_general(
        q, k,
        dimension_numbers=(((1,), (1,)), ((), ())),
        preferred_element_type=jnp.float32,
    )                                                        # (TQ, Lk) f32

    if mask_ref is not None:
        m = mask_ref[0]                                      # (TQ, Lk) int8
        scores = jnp.where(m != 0, jnp.float32(_MASK_FILL), scores)

    # Row-wise softmax in f32 (exact per-row: Lq tiling never splits a row).
    mx = jnp.max(scores, axis=-1, keepdims=True)
    e = jnp.exp(scores - mx)
    denom = jnp.sum(e, axis=-1, keepdims=True)
    attn = e * pl.reciprocal(denom, approx=True)             # EUP, not VALU divide

    attn_ref[0] = attn.astype(attn_ref.dtype)

    out = jnp.dot(attn.astype(v.dtype), v, preferred_element_type=jnp.float32)
    out_ref[0] = out.astype(out_ref.dtype)


def _kernel_masked(q_ref, k_ref, v_ref, mask_ref, out_ref, attn_ref, *, inv_temp):
    _sdpa_body(q_ref, k_ref, v_ref, mask_ref, out_ref, attn_ref, inv_temp)


def _kernel_unmasked(q_ref, k_ref, v_ref, out_ref, attn_ref, *, inv_temp):
    _sdpa_body(q_ref, k_ref, v_ref, None, out_ref, attn_ref, inv_temp)


def _choose_tq(Lq, Lk, D, Dv, in_itemsize, attn_itemsize, masked):
    """Largest multiple-of-8 query tile dividing Lq that fits a conservative
    VMEM budget (capped at 512 rows to keep the pipeline deep); falls back to
    a single Lq tile for short / odd sequence lengths."""
    budget = 24 * 1024 * 1024                 # headroom under 32 MiB scoped VMEM (all gens)
    resident = 2 * Lk * (D + Dv) * in_itemsize             # double-buffered k, v
    per_row = (2 * (D + Dv) * in_itemsize                  # q + out tiles (x2 buffers)
               + 2 * Lk * attn_itemsize                    # attn tile (x2 buffers)
               + 2 * Lk * 4)                               # in-kernel f32 scores/exp temps
    if masked:
        per_row += 2 * Lk                                  # int8 mask tile (x2 buffers)
    cap = (budget - resident) // per_row if budget > resident else 0
    cap = max(8, cap)

    limit = min(Lq, cap, 512)
    best = 0
    t = 8
    while t <= limit:
        if Lq % t == 0:
            best = t
        t += 8
    return best if best > 0 else Lq


def scaled_dot_product_attention(q, k, v, temperature, mask=None):
    """Pallas implementation of ScaledDotProductAttention.forward.

    q: (B, Lq, D), k: (B, Lk, D), v: (B, Lk, Dv), mask: (B, Lq, Lk) bool
    Returns (output, attn), matching the PyTorch module.
    """
    B, Lq, D = q.shape
    Bk, Lk, Dk = k.shape
    Bv, Lv, Dv = v.shape
    assert B == Bk == Bv and D == Dk and Lk == Lv

    masked = mask is not None
    attn_dtype = q.dtype  # keep attn in the input dtype (bf16 halves the writeback)
    inv_temp = 1.0 / float(temperature)

    in_itemsize = jnp.dtype(q.dtype).itemsize
    attn_itemsize = jnp.dtype(attn_dtype).itemsize
    TQ = _choose_tq(Lq, Lk, D, Dv, in_itemsize, attn_itemsize, masked)
    assert Lq % TQ == 0
    grid = (B, Lq // TQ)

    q_spec = pl.BlockSpec((1, TQ, D), lambda b, i: (b, i, 0))
    k_spec = pl.BlockSpec((1, Lk, D), lambda b, i: (b, 0, 0))   # resident across Lq tiles
    v_spec = pl.BlockSpec((1, Lk, Dv), lambda b, i: (b, 0, 0))  # resident across Lq tiles
    mask_spec = pl.BlockSpec((1, TQ, Lk), lambda b, i: (b, i, 0))
    out_spec = pl.BlockSpec((1, TQ, Dv), lambda b, i: (b, i, 0))
    attn_spec = pl.BlockSpec((1, TQ, Lk), lambda b, i: (b, i, 0))

    out_shapes = (
        jax.ShapeDtypeStruct((B, Lq, Dv), q.dtype),      # output
        jax.ShapeDtypeStruct((B, Lq, Lk), attn_dtype),   # attn
    )

    compiler_params = pltpu.CompilerParams(
        dimension_semantics=("parallel", "parallel"),
        vmem_limit_bytes=32 * 1024 * 1024,
    )

    # Advisory cost model so XLA schedules the custom call sensibly.
    bytes_accessed = (
        q.size * in_itemsize + k.size * in_itemsize + v.size * in_itemsize
        + B * Lq * Dv * in_itemsize + B * Lq * Lk * attn_itemsize
        + (B * Lq * Lk if masked else 0)
    )
    cost = pl.CostEstimate(
        flops=2 * B * Lq * Lk * (D + Dv),
        transcendentals=B * Lq * Lk,
        bytes_accessed=bytes_accessed,
    )

    if masked:
        kernel = functools.partial(_kernel_masked, inv_temp=inv_temp)
        in_specs = [q_spec, k_spec, v_spec, mask_spec]
        args = (q, k, v, mask.astype(jnp.int8))
    else:
        # No dummy zero mask: skip the mask DMA and the compare/select entirely.
        kernel = functools.partial(_kernel_unmasked, inv_temp=inv_temp)
        in_specs = [q_spec, k_spec, v_spec]
        args = (q, k, v)

    fn = pl.pallas_call(
        kernel,
        out_shape=out_shapes,
        grid_spec=pltpu.PrefetchScalarGridSpec(
            num_scalar_prefetch=0,
            grid=grid,
            in_specs=in_specs,
            out_specs=[out_spec, attn_spec],
        ),
        compiler_params=compiler_params,
        cost_estimate=cost,
    )
    output, attn = fn(*args)
    return output, attn


def _reference(q, k, v, temperature, mask=None):
    qf = q.astype(jnp.float32)
    kf = k.astype(jnp.float32)
    vf = v.astype(jnp.float32)
    attn = jnp.einsum("bqd,bkd->bqk", qf, kf) / temperature
    if mask is not None:
        attn = jnp.where(mask, -jnp.inf, attn)
    attn = jax.nn.softmax(attn, axis=2)
    out = jnp.einsum("bqk,bkd->bqd", attn, vf)
    return out.astype(q.dtype), attn.astype(q.dtype)


def _check(name, got, want, atol=2e-3, rtol=2e-3):
    assert jnp.allclose(got, want, atol=atol, rtol=rtol), f"{name} mismatch"


if __name__ == "__main__":
    key = jax.random.PRNGKey(0)

    # --- Test 1/2: small shapes consistent with the module's bmm-based forward.
    B, Lq, Lk, D, Dv = 2, 8, 8, 32, 32
    temperature = math.sqrt(D)  # FastSpeech2 choice: sqrt(d_k)

    kq, kk, kv, km, key = jax.random.split(key, 5)
    q = jax.random.normal(kq, (B, Lq, D), dtype=jnp.float32)
    k = jax.random.normal(kk, (B, Lk, D), dtype=jnp.float32)
    v = jax.random.normal(kv, (B, Lk, Dv), dtype=jnp.float32)

    # Boolean mask: True == position masked out (as in masked_fill).
    # Keep at least one unmasked key per query row (typical padding masks).
    mask = jax.random.uniform(km, (B, Lq, Lk)) > 0.8
    mask = mask.at[:, :, 0].set(False)

    out, attn = scaled_dot_product_attention(q, k, v, temperature, mask)
    out = jax.block_until_ready(out)
    attn = jax.block_until_ready(attn)
    out_ref, attn_ref = _reference(q, k, v, temperature, mask)
    _check("output (masked)", out, out_ref)
    _check("attn (masked)", attn, attn_ref)

    out2, attn2 = scaled_dot_product_attention(q, k, v, temperature, None)
    out2 = jax.block_until_ready(out2)
    attn2 = jax.block_until_ready(attn2)
    out2_ref, attn2_ref = _reference(q, k, v, temperature, None)
    _check("output (no mask)", out2, out2_ref)
    _check("attn (no mask)", attn2, attn2_ref)

    # --- Test 3: exercises the tiled-Lq (multi-step grid) path.
    B3, Lq3, Lk3, D3 = 1, 1024, 128, 32
    kq, kk, kv, km, key = jax.random.split(key, 5)
    q3 = jax.random.normal(kq, (B3, Lq3, D3), dtype=jnp.float32)
    k3 = jax.random.normal(kk, (B3, Lk3, D3), dtype=jnp.float32)
    v3 = jax.random.normal(kv, (B3, Lk3, D3), dtype=jnp.float32)
    mask3 = jax.random.uniform(km, (B3, Lq3, Lk3)) > 0.8
    mask3 = mask3.at[:, :, 0].set(False)

    out3, attn3 = scaled_dot_product_attention(q3, k3, v3, math.sqrt(D3), mask3)
    out3 = jax.block_until_ready(out3)
    attn3 = jax.block_until_ready(attn3)
    out3_ref, attn3_ref = _reference(q3, k3, v3, math.sqrt(D3), mask3)
    _check("output (tiled)", out3, out3_ref)
    _check("attn (tiled)", attn3, attn3_ref)

    print("KERNEL_OK")
</pallas_src>

<mosaic_0001>
module attributes {stable_mosaic.version = 11 : i64} {
  func.func @_kernel_masked(%arg0: i32, %arg1: i32, %arg2: memref<1x8x32xf32, #tpu.memory_space<vmem>>, %arg3: memref<1x8x32xf32, #tpu.memory_space<vmem>>, %arg4: memref<1x8x32xf32, #tpu.memory_space<vmem>>, %arg5: memref<1x8x8xi8, #tpu.memory_space<vmem>>, %arg6: memref<1x8x32xf32, #tpu.memory_space<vmem>>, %arg7: memref<1x8x8xf32, #tpu.memory_space<vmem>>) attributes {dimension_semantics = [#tpu.dimension_semantics<parallel>, #tpu.dimension_semantics<parallel>], iteration_bounds = array<i64: 2, 1>, scalar_prefetch = 0 : i64, scratch_operands = 0 : i64, tpu.core_type = #tpu.core_type<tc>, window_params = [{transform_indices = @transform_0, window_bounds = array<i64: 1, 8, 32>}, {transform_indices = @transform_1, window_bounds = array<i64: 1, 8, 32>}, {transform_indices = @transform_2, window_bounds = array<i64: 1, 8, 32>}, {transform_indices = @transform_3, window_bounds = array<i64: 1, 8, 8>}, {transform_indices = @transform_4, window_bounds = array<i64: 1, 8, 32>}, {transform_indices = @transform_5, window_bounds = array<i64: 1, 8, 8>}]} {
    %c0 = arith.constant 0 : index
    %c0_0 = arith.constant 0 : index
    %c0_1 = arith.constant 0 : index
    %0 = vector.load %arg2[%c0, %c0_0, %c0_1] : memref<1x8x32xf32, #tpu.memory_space<vmem>>, vector<1x8x32xf32>
    %1 = vector.shape_cast %0 : vector<1x8x32xf32> to vector<8x32xf32>
    %cst = arith.constant 0.176776692 : f32
    %2 = vector.broadcast %cst : f32 to vector<8x32xf32>
    %3 = arith.mulf %1, %2 : vector<8x32xf32>
    %c0_2 = arith.constant 0 : index
    %c0_3 = arith.constant 0 : index
    %c0_4 = arith.constant 0 : index
    %4 = vector.load %arg3[%c0_2, %c0_3, %c0_4] : memref<1x8x32xf32, #tpu.memory_space<vmem>>, vector<1x8x32xf32>
    %5 = vector.shape_cast %4 : vector<1x8x32xf32> to vector<8x32xf32>
    %c0_5 = arith.constant 0 : index
    %c0_6 = arith.constant 0 : index
    %c0_7 = arith.constant 0 : index
    %6 = vector.load %arg4[%c0_5, %c0_6, %c0_7] : memref<1x8x32xf32, #tpu.memory_space<vmem>>, vector<1x8x32xf32>
    %7 = vector.shape_cast %6 : vector<1x8x32xf32> to vector<8x32xf32>
    %cst_8 = arith.constant dense<0.000000e+00> : vector<8x8xf32>
    %8 = tpu.matmul %3, %5, %cst_8 {dimension_numbers = #tpu.dot_dimension_numbers<[1], [1], [0], [0], [0, 0, 1, 0], [], []>} : vector<8x32xf32>, vector<8x32xf32>, vector<8x8xf32> -> vector<8x8xf32>
    %c0_9 = arith.constant 0 : index
    %c0_10 = arith.constant 0 : index
    %c0_11 = arith.constant 0 : index
    %9 = vector.load %arg5[%c0_9, %c0_10, %c0_11] : memref<1x8x8xi8, #tpu.memory_space<vmem>>, vector<1x8x8xi8>
    %10 = vector.shape_cast %9 : vector<1x8x8xi8> to vector<8x8xi8>
    %c0_i8 = arith.constant 0 : i8
    %11 = vector.broadcast %c0_i8 : i8 to vector<8x8xi8>
    %12 = arith.cmpi ne, %10, %11 : vector<8x8xi8>
    %cst_12 = arith.constant -1.000000e+30 : f32
    %13 = vector.broadcast %cst_12 : f32 to vector<8x8xf32>
    %14 = arith.select %12, %13, %8 : vector<8x8xi1>, vector<8x8xf32>
    %cst_13 = arith.constant dense<0xFF800000> : vector<8xf32>
    %15 = vector.multi_reduction <maximumf>, %14, %cst_13 [1] : vector<8x8xf32> to vector<8xf32>
    %16 = vector.shape_cast %15 : vector<8xf32> to vector<8x1xf32>
    %17 = vector.broadcast %16 : vector<8x1xf32> to vector<8x8xf32>
    %18 = arith.subf %14, %17 : vector<8x8xf32>
    %19 = math.exp %18 : vector<8x8xf32>
    %cst_14 = arith.constant dense<0.000000e+00> : vector<8xf32>
    %20 = vector.multi_reduction <add>, %19, %cst_14 [1] : vector<8x8xf32> to vector<8xf32>
    %21 = vector.shape_cast %20 : vector<8xf32> to vector<8x1xf32>
    %22 = tpu.reciprocal %21 {approx = true} : vector<8x1xf32> -> vector<8x1xf32>
    %23 = vector.broadcast %22 : vector<8x1xf32> to vector<8x8xf32>
    %24 = arith.mulf %19, %23 : vector<8x8xf32>
    %c0_15 = arith.constant 0 : index
    %c0_16 = arith.constant 0 : index
    %c0_17 = arith.constant 0 : index
    %25 = vector.load %arg7[%c0_15, %c0_16, %c0_17] : memref<1x8x8xf32, #tpu.memory_space<vmem>>, vector<1x8x8xf32>
    %26 = vector.shape_cast %25 : vector<1x8x8xf32> to vector<8x8xf32>
    %27 = vector.shape_cast %24 : vector<8x8xf32> to vector<1x8x8xf32>
    tpu.vector_store %arg7[%c0_15, %c0_16, %c0_17], %27 {strides = array<i32>} : memref<1x8x8xf32, #tpu.memory_space<vmem>>, vector<1x8x8xf32>,
    %cst_18 = arith.constant dense<0.000000e+00> : vector<8x32xf32>
    %28 = tpu.matmul %24, %7, %cst_18 {dimension_numbers = #tpu.dot_dimension_numbers<[1], [0], [0], [1], [0, 0, 1, 1], [], []>} : vector<8x8xf32>, vector<8x32xf32>, vector<8x32xf32> -> vector<8x32xf32>
    %c0_19 = arith.constant 0 : index
    %c0_20 = arith.constant 0 : index
    %c0_21 = arith.constant 0 : index
    %29 = vector.load %arg6[%c0_19, %c0_20, %c0_21] : memref<1x8x32xf32, #tpu.memory_space<vmem>>, vector<1x8x32xf32>
    %30 = vector.shape_cast %29 : vector<1x8x32xf32> to vector<8x32xf32>
    %31 = vector.shape_cast %28 : vector<8x32xf32> to vector<1x8x32xf32>
    tpu.vector_store %arg6[%c0_19, %c0_20, %c0_21], %31 {strides = array<i32>} : memref<1x8x32xf32, #tpu.memory_space<vmem>>, vector<1x8x32xf32>,
    return
  }
  func.func @transform_0(%arg0: i32, %arg1: i32) -> (i32, i32, i32) {
    %c0_i32 = arith.constant 0 : i32
    %c0_i32_0 = arith.constant 0 : i32
    return %arg0, %arg1, %c0_i32 : i32, i32, i32
  }
  func.func @transform_1(%arg0: i32, %arg1: i32) -> (i32, i32, i32) {
    %c0_i32 = arith.constant 0 : i32
    %c0_i32_0 = arith.constant 0 : i32
    %c0_i32_1 = arith.constant 0 : i32
    return %arg0, %c0_i32, %c0_i32_0 : i32, i32, i32
  }
  func.func @transform_2(%arg0: i32, %arg1: i32) -> (i32, i32, i32) {
    %c0_i32 = arith.constant 0 : i32
    %c0_i32_0 = arith.constant 0 : i32
    %c0_i32_1 = arith.constant 0 : i32
    return %arg0, %c0_i32, %c0_i32_0 : i32, i32, i32
  }
  func.func @transform_3(%arg0: i32, %arg1: i32) -> (i32, i32, i32) {
    %c0_i32 = arith.constant 0 : i32
    %c0_i32_0 = arith.constant 0 : i32
    return %arg0, %arg1, %c0_i32 : i32, i32, i32
  }
  func.func @transform_4(%arg0: i32, %arg1: i32) -> (i32, i32, i32) {
    %c0_i32 = arith.constant 0 : i32
    %c0_i32_0 = arith.constant 0 : i32
    return %arg0, %arg1, %c0_i32 : i32, i32, i32
  }
  func.func @transform_5(%arg0: i32, %arg1: i32) -> (i32, i32, i32) {
    %c0_i32 = arith.constant 0 : i32
    %c0_i32_0 = arith.constant 0 : i32
    return %arg0, %arg1, %c0_i32 : i32, i32, i32
  }
}

</mosaic_0001>

<llo_original>
// kernel: tpu_custom_call.1
$region0: #{tpu_custom_call.1}
  #allocation0 [shape = 'u32[]', space=smem, size = 0x4, offset = 0x4, fixed_abs, tag = 'smem constant byte address 0x4 - core index']
  #allocation1 [shape = 'u32[72,128]{1,0:T(1,128)}', space=vmem, size = 0x9000, scoped, tag = 'internal scratch']
  %s0 = inlined_call_operand.hbm [shape: f32[2,8,32], index: 0, kind: input, shape index: {}]
  %s1 = inlined_call_operand.hbm [shape: f32[2,8,32], index: 1, kind: input, shape index: {}]
  %s2 = inlined_call_operand.hbm [shape: f32[2,8,32], index: 2, kind: input, shape index: {}]
  %s3 = inlined_call_operand.hbm [shape: s8[2,8,8], index: 3, kind: input, shape index: {}]
  %s4 = inlined_call_operand.hbm [shape: f32[2,8,32], index: 4, kind: output, shape index: {0}]
  %s5 = inlined_call_operand.hbm [shape: f32[2,8,8], index: 5, kind: output, shape index: {1}]
  %6 = xla_tuple %s4, %s5
  %s7 = sld [smem:[#allocation0]]
  $region73: #{tpu_custom_call.1} parent=0
    _
  %s9 = ssub.s32 1, %s7
  %s10 = scalar_select 0, %s9, %s7
  $region1: #{tpu_custom_call.1} parent=0
    #allocation2 [shape = 'u8[8192]{0}', space=vmem, size = 0x2000, scoped, tag = 'input window, operand 0']
    #allocation3 [shape = 's32[2]{0}', space=sflag, size = 0x8, scoped, tag = 'scoped memory for tpu_custom_call.1']
    #allocation4 [shape = 's32[2]{0}', space=sflag, size = 0x8, scoped, tag = 'scoped memory for tpu_custom_call.1']
    #allocation5 [shape = 'u8[8192]{0}', space=vmem, size = 0x2000, scoped, tag = 'input window, operand 1']
    #allocation6 [shape = 's32[2]{0}', space=sflag, size = 0x8, scoped, tag = 'scoped memory for tpu_custom_call.1']
    #allocation7 [shape = 'u8[8192]{0}', space=vmem, size = 0x2000, scoped, tag = 'input window, operand 2']
    #allocation8 [shape = 'u8[2048]{0}', space=vmem, size = 0x800, scoped, tag = 'input window, operand 3']
    #allocation9 [shape = 's32[2]{0}', space=sflag, size = 0x8, scoped, tag = 'scoped memory for tpu_custom_call.1']
    #allocation10 [shape = 'u8[8192]{0}', space=vmem, size = 0x2000, scoped, tag = 'output window, operand 0']
    #allocation11 [shape = 'u8[8192]{0}', space=vmem, size = 0x2000, scoped, tag = 'output window, operand 1']
    #allocation12 [shape = 's32[2]{0}', space=sflag, size = 0x8, scoped, tag = 'scoped memory for tpu_custom_call.1']
    %11 = vsyncpa [#allocation3], 0
    %s12 = scalar_lea.sflag [#allocation3], 1
    %13 = vsyncpa %s12, 0
    %14 = vsyncpa [#allocation6], 0
    %s15 = scalar_lea.sflag [#allocation6], 1
    %16 = vsyncpa %s15, 0
    %17 = vsyncpa [#allocation9], 0
    %s18 = scalar_lea.sflag [#allocation9], 1
    %19 = vsyncpa %s18, 0
    %20 = vsyncpa [#allocation4], 0
    %s21 = scalar_lea.sflag [#allocation4], 1
    %22 = vsyncpa %s21, 0
    %23 = vsyncpa [#allocation12], 0
    %s24 = scalar_lea.sflag [#allocation12], 1
    %25 = vsyncpa %s24, 0
    loop: start=0, step=1, limit=4
    $region2: #{tpu_custom_call.1} parent=1 // loop_pre_header
      _
    $region3: #{tpu_custom_call.1} parent=1 // loop_header
      %s27 = sphi 0, %s31
      %p28 = scmp.ge.s32.totalorder %s27, 4
      %s34 = sphi 0, %s46
      %s35 = sphi 0, %s42
      %s36 = sphi 0, %s34
      %s37 = sphi 0, %s35
      %s38 = sphi 0, %s36
      %s39 = sphi 0, %s37
      %s51 = sphi 0, %s53
      %s54 = sphi 0, %s51
      %s55 = sphi 0, %s54
      %s71 = sphi 0, %s55
      %s77 = sphi 0, %s79
      %s80 = sphi 0, %s77
      %s81 = sphi 0, %s80
      %s97 = sphi 0, %s81
      %s103 = sphi 0, %s105
      %s106 = sphi 0, %s103
      %s107 = sphi 0, %s106
      %s123 = sphi 0, %s107
      %s131 = sphi 0, %s133
      %s134 = sphi 0, %s131
      %s135 = sphi 0, %s134
      %s151 = sphi 0, %s135
      %s159 = sphi 0, %s161
      %s162 = sphi 0, %s159
      %s163 = sphi 0, %s162
      %s179 = sphi 0, %s163
      %s187 = sphi 0, %s189
      %s190 = sphi 0, %s187
      %s191 = sphi 0, %s190
      %s207 = sphi 0, %s191
    $region4: #{tpu_custom_call.1} parent=1 // loop_header_branch
      %30 = sbr.rel (%p28) target = $region8
    $region5: #{tpu_custom_call.1} parent=1 // loop_body
      %s32 = ssub.s32 %s27, 1
      %s33 = ssub.s32 %s27, 2
      %s40 = sadd.s32 1, %s35
      %p41 = scmp.ge.s32.totalorder %s40, 1
      %s42 = scalar_select %p41, 0, %s40
      %s43 = sadd.s32 1, %s34
      %s44 = scalar_select %p41, %s43, %s34
      %p45 = scmp.ge.s32.totalorder %s44, 2
      %s46 = scalar_select %p45, 0, %s44
      %s47 = ssub.s32 %s34, %s46
      %s48 = ssub.s32 %s35, %s42
      %s49 = sor.u32 %s47, %s48
      %p50 = scmp.eq.s32.totalorder %s49, 0
      %s52 = sadd.s32 %s51, 1
      %s53 = scalar_select %p50, %s51, %s52
      %p56 = pneg %p50
      %p57 = scmp.eq.s32.totalorder %s27, 1
      %p58 = por %p56, %p57
      %p59 = scmp.ne.s32.totalorder %s51, %s54
      %p60 = scmp.eq.s32.totalorder %s27, 0
      %p61 = por %p59, %p60
      %p62 = scmp.ne.s32.totalorder %s51, %s54
      %p63 = scmp.eq.s32.totalorder %s32, 1
      %p64 = por %p62, %p63
      %p65 = scmp.ne.s32.totalorder %s54, %s55
      %p66 = scmp.eq.s32.totalorder %s32, 0
      %p67 = por %p65, %p66
      %p68 = scmp.ne.s32.totalorder %s54, %s55
      %p69 = scmp.eq.s32.totalorder %s33, 1
      %p70 = por %p68, %p69
      %p72 = scmp.ne.s32.totalorder %s55, %s71
      %p73 = scmp.eq.s32.totalorder %s33, 0
      %p74 = por %p72, %p73
      %s75 = ssub.s32 %s34, %s46
      %p76 = scmp.eq.s32.totalorder %s75, 0
      %s78 = sadd.s32 %s77, 1
      %s79 = scalar_select %p76, %s77, %s78
      %p82 = pneg %p76
      %p83 = scmp.eq.s32.totalorder %s27, 1
      %p84 = por %p82, %p83
      %p85 = scmp.ne.s32.totalorder %s77, %s80
      %p86 = scmp.eq.s32.totalorder %s27, 0
      %p87 = por %p85, %p86
      %p88 = scmp.ne.s32.totalorder %s77, %s80
      %p89 = scmp.eq.s32.totalorder %s32, 1
      %p90 = por %p88, %p89
      %p91 = scmp.ne.s32.totalorder %s80, %s81
      %p92 = scmp.eq.s32.totalorder %s32, 0
      %p93 = por %p91, %p92
      %p94 = scmp.ne.s32.totalorder %s80, %s81
      %p95 = scmp.eq.s32.totalorder %s33, 1
      %p96 = por %p94, %p95
      %p98 = scmp.ne.s32.totalorder %s81, %s97
      %p99 = scmp.eq.s32.totalorder %s33, 0
      %p100 = por %p98, %p99
      %s101 = ssub.s32 %s34, %s46
      %p102 = scmp.eq.s32.totalorder %s101, 0
      %s104 = sadd.s32 %s103, 1
      %s105 = scalar_select %p102, %s103, %s104
      %p108 = pneg %p102
      %p109 = scmp.eq.s32.totalorder %s27, 1
      %p110 = por %p108, %p109
      %p111 = scmp.ne.s32.totalorder %s103, %s106
      %p112 = scmp.eq.s32.totalorder %s27, 0
      %p113 = por %p111, %p112
      %p114 = scmp.ne.s32.totalorder %s103, %s106
      %p115 = scmp.eq.s32.totalorder %s32, 1
      %p116 = por %p114, %p115
      %p117 = scmp.ne.s32.totalorder %s106, %s107
      %p118 = scmp.eq.s32.totalorder %s32, 0
      %p119 = por %p117, %p118
      %p120 = scmp.ne.s32.totalorder %s106, %s107
      %p121 = scmp.eq.s32.totalorder %s33, 1
      %p122 = por %p120, %p121
      %p124 = scmp.ne.s32.totalorder %s107, %s123
      %p125 = scmp.eq.s32.totalorder %s33, 0
      %p126 = por %p124, %p125
      %s127 = ssub.s32 %s34, %s46
      %s128 = ssub.s32 %s35, %s42
      %s129 = sor.u32 %s127, %s128
      %p130 = scmp.eq.s32.totalorder %s129, 0
      %s132 = sadd.s32 %s131, 1
      %s133 = scalar_select %p130, %s131, %s132
      %p136 = pneg %p130
      %p137 = scmp.eq.s32.totalorder %s27, 1
      %p138 = por %p136, %p137
      %p139 = scmp.ne.s32.totalorder %s131, %s134
      %p140 = scmp.eq.s32.totalorder %s27, 0
      %p141 = por %p139, %p140
      %p142 = scmp.ne.s32.totalorder %s131, %s134
      %p143 = scmp.eq.s32.totalorder %s32, 1
      %p144 = por %p142, %p143
      %p145 = scmp.ne.s32.totalorder %s134, %s135
      %p146 = scmp.eq.s32.totalorder %s32, 0
      %p147 = por %p145, %p146
      %p148 = scmp.ne.s32.totalorder %s134, %s135
      %p149 = scmp.eq.s32.totalorder %s33, 1
      %p150 = por %p148, %p149
      %p152 = scmp.ne.s32.totalorder %s135, %s151
      %p153 = scmp.eq.s32.totalorder %s33, 0
      %p154 = por %p152, %p153
      %s155 = ssub.s32 %s34, %s46
      %s156 = ssub.s32 %s35, %s42
      %s157 = sor.u32 %s155, %s156
      %p158 = scmp.eq.s32.totalorder %s157, 0
      %s160 = sadd.s32 %s159, 1
      %s161 = scalar_select %p158, %s159, %s160
      %p164 = pneg %p158
      %p165 = scmp.eq.s32.totalorder %s27, 1
      %p166 = por %p164, %p165
      %p167 = scmp.ne.s32.totalorder %s159, %s162
      %p168 = scmp.eq.s32.totalorder %s27, 0
      %p169 = por %p167, %p168
      %p170 = scmp.ne.s32.totalorder %s159, %s162
      %p171 = scmp.eq.s32.totalorder %s32, 1
      %p172 = por %p170, %p171
      %p173 = scmp.ne.s32.totalorder %s162, %s163
      %p174 = scmp.eq.s32.totalorder %s32, 0
      %p175 = por %p173, %p174
      %p176 = scmp.ne.s32.totalorder %s162, %s163
      %p177 = scmp.eq.s32.totalorder %s33, 1
      %p178 = por %p176, %p177
      %p180 = scmp.ne.s32.totalorder %s163, %s179
      %p181 = scmp.eq.s32.totalorder %s33, 0
      %p182 = por %p180, %p181
      %s183 = ssub.s32 %s34, %s46
      %s184 = ssub.s32 %s35, %s42
      %s185 = sor.u32 %s183, %s184
      %p186 = scmp.eq.s32.totalorder %s185, 0
      %s188 = sadd.s32 %s187, 1
      %s189 = scalar_select %p186, %s187, %s188
      %p192 = pneg %p186
      %p193 = scmp.eq.s32.totalorder %s27, 1
      %p194 = por %p192, %p193
      %p195 = scmp.ne.s32.totalorder %s187, %s190
      %p196 = scmp.eq.s32.totalorder %s27, 0
      %p197 = por %p195, %p196
      %p198 = scmp.ne.s32.totalorder %s187, %s190
      %p199 = scmp.eq.s32.totalorder %s32, 1
      %p200 = por %p198, %p199
      %p201 = scmp.ne.s32.totalorder %s190, %s191
      %p202 = scmp.eq.s32.totalorder %s32, 0
      %p203 = por %p201, %p202
      %p204 = scmp.ne.s32.totalorder %s190, %s191
      %p205 = scmp.eq.s32.totalorder %s33, 1
      %p206 = por %p204, %p205
      %p208 = scmp.ne.s32.totalorder %s191, %s207
      %p209 = scmp.eq.s32.totalorder %s33, 0
      %p210 = por %p208, %p209
      %p211 = scmp.le.s32.totalorder 1, %s27
      %p212 = scmp.lt.s32.totalorder %s27, 3
      %p213 = pnand %p211, %p212
      %p214 = pneg %p213
      // Predicated region
      $region9: #{tpu_custom_call.1} parent=5 // pred_check
        _
      $region10: #{tpu_custom_call.1} parent=5 // pred_check_branch
        %216 = sbr.rel (%p213) target = $region12
      $region11: #{tpu_custom_call.1} parent=5 // pred_region
        %s217 = ssub.s32 %s27, 1
      $region12: #{tpu_custom_call.1} parent=5 // pred_fallthru
        _
      %p218 = scmp.lt.s32.totalorder %s27, 2
      // Predicated region
      $region13: #{tpu_custom_call.1} parent=5 // pred_check
        %p219 = pneg %p218
      $region14: #{tpu_custom_call.1} parent=5 // pred_check_branch
        %221 = sbr.rel (%p219) target = $region16
      $region15: #{tpu_custom_call.1} parent=5 // pred_region
        // Predicated region
        $region17: #{tpu_custom_call.1} parent=15 // pred_check
          %p222 = pneg %p61
        $region18: #{tpu_custom_call.1} parent=15 // pred_check_branch
          %224 = sbr.rel (%p222) target = $region20
        $region19: #{tpu_custom_call.1} parent=15 // pred_region
          %s225 = sand.u32 %s51, 1
          %s226 = scalar_lea.sflag [#allocation3], %s225
          %s227 = sand.u32 %s51, 1
          %s228 = smul.addr %s227, 8
          %s229 = scalar_lea.vmem [#allocation2], %s228
          %231 = vsyncadd %s226, 0
          %s232 = sadd.s32 %s35, %s34
          %s233 = smul.addr %s232, 8
          %s234 = scalar_lea.hbm %s0, %s233
          %s236 = sshll.u32 %s234, 4
          %s237 = int_to_ptr.hbm [resolvable:$true] %s236
          %s238 = sshll.u32 %s229, 4
          %s239 = int_to_ptr.vmem [resolvable:$true] %s238
          %241 = dma.hbm_to_vmem [thread:$0]  %s237, 128, %s239, %s226
        $region20: #{tpu_custom_call.1} parent=15 // pred_fallthru
          _
        // Predicated region
        $region21: #{tpu_custom_call.1} parent=15 // pred_check
          %p242 = pneg %p87
        $region22: #{tpu_custom_call.1} parent=15 // pred_check_branch
          %244 = sbr.rel (%p242) target = $region24
        $region23: #{tpu_custom_call.1} parent=15 // pred_region
          %s245 = sand.u32 %s27, 1
          %s246 = scalar_lea.sflag [#allocation6], %s245
          %s247 = sand.u32 %s77, 1
          %s248 = smul.addr %s247, 8
          %s249 = scalar_lea.vmem [#allocation5], %s248
          %251 = vsyncadd %s246, 0
          %s252 = smul.addr %s34, 8
          %s253 = scalar_lea.hbm %s1, %s252
          %s255 = sshll.u32 %s253, 4
          %s256 = int_to_ptr.hbm [resolvable:$true] %s255
          %s257 = sshll.u32 %s249, 4
          %s258 = int_to_ptr.vmem [resolvable:$true] %s257
          %260 = dma.hbm_to_vmem [thread:$0]  %s256, 128, %s258, %s246
        $region24: #{tpu_custom_call.1} parent=15 // pred_fallthru
          _
        // Predicated region
        $region25: #{tpu_custom_call.1} parent=15 // pred_check
          %p261 = pneg %p113
        $region26: #{tpu_custom_call.1} parent=15 // pred_check_branch
          %263 = sbr.rel (%p261) target = $region28
        $region27: #{tpu_custom_call.1} parent=15 // pred_region
          %s264 = sand.u32 %s27, 1
          %s265 = scalar_lea.sflag [#allocation6], %s264
          %s266 = sand.u32 %s103, 1
          %s267 = smul.addr %s266, 8
          %s268 = scalar_lea.vmem [#allocation7], %s267
          %270 = vsyncadd %s265, 0
          %s271 = smul.addr %s34, 8
          %s272 = scalar_lea.hbm %s2, %s271
          %s274 = sshll.u32 %s272, 4
          %s275 = int_to_ptr.hbm [resolvable:$true] %s274
          %s276 = sshll.u32 %s268, 4
          %s277 = int_to_ptr.vmem [resolvable:$true] %s276
          %279 = dma.hbm_to_vmem [thread:$0]  %s275, 128, %s277, %s265
        $region28: #{tpu_custom_call.1} parent=15 // pred_fallthru
          _
        // Predicated region
        $region29: #{tpu_custom_call.1} parent=15 // pred_check
          %p280 = pneg %p141
        $region30: #{tpu_custom_call.1} parent=15 // pred_check_branch
          %282 = sbr.rel (%p280) target = $region32
        $region31: #{tpu_custom_call.1} parent=15 // pred_region
          %s283 = sand.u32 %s131, 1
          %s284 = scalar_lea.sflag [#allocation9], %s283
          %s285 = sand.u32 %s131, 1
          %s286 = smul.addr %s285, 2
          %s287 = scalar_lea.vmem [#allocation8], %s286
          %289 = vsyncadd %s284, 0
          %s290 = sadd.s32 %s35, %s34
          %s291 = smul.addr %s290, 2
          %s292 = scalar_lea.hbm %s3, %s291
          %s294 = sshll.u32 %s292, 4
          %s295 = int_to_ptr.hbm [resolvable:$true] %s294
          %s296 = sshll.u32 %s287, 4
          %s297 = int_to_ptr.vmem [resolvable:$true] %s296
          %299 = dma.hbm_to_vmem [thread:$0]  %s295, 32, %s297, %s284
        $region32: #{tpu_custom_call.1} parent=15 // pred_fallthru
          _
      $region16: #{tpu_custom_call.1} parent=5 // pred_fallthru
        _
      %p300 = scmp.le.s32.totalorder 1, %s27
      %p301 = scmp.lt.s32.totalorder %s27, 3
      %p302 = pnand %p300, %p301
      %p303 = pneg %p302
      // Predicated region
      $region33: #{tpu_custom_call.1} parent=5 // pred_check
        _
      $region34: #{tpu_custom_call.1} parent=5 // pred_check_branch
        %305 = sbr.rel (%p302) target = $region36
      $region35: #{tpu_custom_call.1} parent=5 // pred_region
        %s306 = ssub.s32 %s27, 1
        %s307 = sand.u32 %s54, 1
        %s308 = scalar_lea.sflag [#allocation3], %s307
        %s309 = sand.u32 %s54, 1
        %s310 = smul.addr %s309, 8
        %s311 = scalar_lea.vmem [#allocation2], %s310
        // Predicated region
        $region37: #{tpu_custom_call.1} parent=35 // pred_check
          %p312 = pneg %p67
        $region38: #{tpu_custom_call.1} parent=35 // pred_check_branch
          %314 = sbr.rel (%p312) target = $region40
        $region39: #{tpu_custom_call.1} parent=35 // pred_region
          %316 = dma.done %s308, 128
        $region40: #{tpu_custom_call.1} parent=35 // pred_fallthru
          _
        %s317 = sand.u32 %s32, 1
        %s318 = scalar_lea.sflag [#allocation6], %s317
        %s319 = sand.u32 %s80, 1
        %s320 = smul.addr %s319, 8
        %s321 = scalar_lea.vmem [#allocation5], %s320
        // Predicated region
        $region41: #{tpu_custom_call.1} parent=35 // pred_check
          %p322 = pneg %p93
        $region42: #{tpu_custom_call.1} parent=35 // pred_check_branch
          %324 = sbr.rel (%p322) target = $region44
        $region43: #{tpu_custom_call.1} parent=35 // pred_region
          %326 = dma.done %s318, 128
        $region44: #{tpu_custom_call.1} parent=35 // pred_fallthru
          _
        %s327 = sand.u32 %s32, 1
        %s328 = scalar_lea.sflag [#allocation6], %s327
        %s329 = sand.u32 %s106, 1
        %s330 = smul.addr %s329, 8
        %s331 = scalar_lea.vmem [#allocation7], %s330
        // Predicated region
        $region45: #{tpu_custom_call.1} parent=35 // pred_check
          %p332 = pneg %p119
        $region46: #{tpu_custom_call.1} parent=35 // pred_check_branch
          %334 = sbr.rel (%p332) target = $region48
        $region47: #{tpu_custom_call.1} parent=35 // pred_region
          %336 = dma.done %s328, 128
        $region48: #{tpu_custom_call.1} parent=35 // pred_fallthru
          _
        %s337 = sand.u32 %s134, 1
        %s338 = scalar_lea.sflag [#allocation9], %s337
        %s339 = sand.u32 %s134, 1
        %s340 = smul.addr %s339, 2
        %s341 = scalar_lea.vmem [#allocation8], %s340
        // Predicated region
        $region49: #{tpu_custom_call.1} parent=35 // pred_check
          %p342 = pneg %p147
        $region50: #{tpu_custom_call.1} parent=35 // pred_check_branch
          %344 = sbr.rel (%p342) target = $region52
        $region51: #{tpu_custom_call.1} parent=35 // pred_region
          %346 = dma.done %s338, 32
        $region52: #{tpu_custom_call.1} parent=35 // pred_fallthru
          _
        %s347 = sand.u32 %s54, 1
        %s348 = scalar_lea.sflag [#allocation3], %s347
        %s349 = sand.u32 %s54, 1
        %s350 = smul.addr %s349, 8
        %s351 = scalar_lea.vmem [#allocation2], %s350
        %p352 = pneg %p67
        %p353 = pneg %p64
        %s354 = sand.u32 %s32, 1
        %s355 = scalar_lea.sflag [#allocation6], %s354
        %s356 = sand.u32 %s80, 1
        %s357 = smul.addr %s356, 8
        %s358 = scalar_lea.vmem [#allocation5], %s357
        %p359 = pneg %p93
        %p360 = pneg %p90
        %s361 = sand.u32 %s32, 1
        %s362 = scalar_lea.sflag [#allocation6], %s361
        %s363 = sand.u32 %s106, 1
        %s364 = smul.addr %s363, 8
        %s365 = scalar_lea.vmem [#allocation7], %s364
        %p366 = pneg %p119
        %p367 = pneg %p116
        %s368 = sand.u32 %s134, 1
        %s369 = scalar_lea.sflag [#allocation9], %s368
        %s370 = sand.u32 %s134, 1
        %s371 = smul.addr %s370, 2
        %s372 = scalar_lea.vmem [#allocation8], %s371
        %p373 = pneg %p147
        %p374 = pneg %p144
        %p375 = pneg %p175
        %p376 = pneg %p172
        %s377 = sand.u32 %s162, 1
        %s378 = scalar_lea.sflag [#allocation4], %s377
        %s379 = sand.u32 %s162, 1
        %s380 = smul.addr %s379, 8
        %s381 = scalar_lea.vmem [#allocation10], %s380
        %p382 = pneg %p203
        %p383 = pneg %p200
        %s384 = sand.u32 %s190, 1
        %s385 = scalar_lea.sflag [#allocation12], %s384
        %s386 = sand.u32 %s190, 1
        %s387 = smul.addr %s386, 8
        %s388 = scalar_lea.vmem [#allocation11], %s387
        %v391 = vld [vmem:[%s311] sm:$0xff]
        %v392 = vmul.f32 %v391, 0.17677669
        %v393 = vld [vmem:[%s321] sm:$0xff]
        %v394 = vld [vmem:[%s331] sm:$0xff]
        %vm395 = vcmask 261120
        %v397 = vsel %vm395, %v392, 0
        %v400 = vsel %vm395, %v393, 0
        %402 = vmatpush.xpose.msra.mxu0 0.0
        %403 = vmatpush.xpose.msra.mxu0 0.0
        %404 = vmatpush.xpose.msra.mxu0 0.0
        %405 = vmatpush.xpose.msra.mxu0 0.0
        %406 = vmatpush.xpose.msra.mxu0 0.0
        %407 = vmatpush.xpose.msra.mxu0 0.0
        %408 = vmatpush.xpose.msra.mxu0 0.0
        %409 = vmatpush.xpose.msra.mxu0 0.0
        %410 = vmatpush.xpose.msra.mxu0 0.0
        %411 = vmatpush.xpose.msra.mxu0 0.0
        %412 = vmatpush.xpose.msra.mxu0 0.0
        %413 = vmatpush.xpose.msra.mxu0 0.0
        %414 = vmatpush.xpose.msra.mxu0 0.0
        %415 = vmatpush.xpose.msra.mxu0 0.0
        %416 = vmatpush.xpose.msra.mxu0 0.0
        %417 = vmatpush.xpose.msra.mxu0 %v400
        %418 = vmatmul.f32.gmra.mxu0 %v397
        %v419 = vpop.f32.mrf.mxu0
        %v420 = vadd.f32 0.0, %v419
        %421 = vdwg.mxu0
        %v422 = vld [vmem:[%s341] sm:$0x3]
        %vm423 = vnez %v422
        %v424 = vsel %vm423, 16843009, 0
        %v425 = vunpack.c.0.s8 %v424
        %vm426 = vcmp.ne.s32.totalorder %v425, 0
        %v427 = vsel %vm426, -1e+30, %v420
        %vm428 = vcmask 64512
        %v429 = vsel %vm428, %v427, -inf
        %430 = vmax.xlane.f32.xlu0 %v429
        %v431 = vpop.xlane.xlu0 %430
        %v432 = vsub.f32 %v427, %v431
        %v433 = vmul.f32 %v432, 1.442695
        %v434 = vpow.pop %v433
        %v435 = vsel %vm428, %v434, 0.0
        %436 = vadd.xlane.f32.xlu0 %v435
        %v437 = vpop.xlane.xlu0 %436
        %v438 = vrcp.pop %v437
        %v439 = vmul.f32 %v434, %v438
        %440 = vst.msk [vmem:[%s388] sm:$0xff] %vm428, %v439
        %v442 = vsel %vm428, %v439, 0
        %444 = vmatpush.msra.mxu0 0.0
        %445 = vmatpush.msra.mxu0 0.0
        %446 = vmatpush.msra.mxu0 0.0
        %447 = vmatpush.msra.mxu0 0.0
        %448 = vmatpush.msra.mxu0 0.0
        %449 = vmatpush.msra.mxu0 0.0
        %450 = vmatpush.msra.mxu0 0.0
        %451 = vmatpush.msra.mxu0 0.0
        %452 = vmatpush.msra.mxu0 0.0
        %453 = vmatpush.msra.mxu0 0.0
        %454 = vmatpush.msra.mxu0 0.0
        %455 = vmatpush.msra.mxu0 0.0
        %456 = vmatpush.msra.mxu0 0.0
        %457 = vmatpush.msra.mxu0 0.0
        %458 = vmatpush.msra.mxu0 0.0
        %459 = vmatpush.msra.mxu0 %v394
        %460 = vmatmul.f32.gmra.mxu0 %v442
        %v461 = vpop.f32.mrf.mxu0
        %v462 = vadd.f32 0.0, %v461
        %463 = vdwg.mxu0
        %464 = vst.msk [vmem:[%s381] sm:$0xff] %vm395, %v462
        %s465 = sand.u32 %s162, 1
        %s466 = scalar_lea.sflag [#allocation4], %s465
        %s467 = sand.u32 %s162, 1
        %s468 = smul.addr %s467, 8
        %s469 = scalar_lea.vmem [#allocation10], %s468
        %s470 = sand.u32 %s190, 1
        %s471 = scalar_lea.sflag [#allocation12], %s470
        %s472 = sand.u32 %s190, 1
        %s473 = smul.addr %s472, 8
        %s474 = scalar_lea.vmem [#allocation11], %s473
        // Predicated region
        $region53: #{tpu_custom_call.1} parent=35 // pred_check
          %p475 = pneg %p172
        $region54: #{tpu_custom_call.1} parent=35 // pred_check_branch
          %477 = sbr.rel (%p475) target = $region56
        $region55: #{tpu_custom_call.1} parent=35 // pred_region
          %479 = vsyncadd %s466, 0
          %s480 = sadd.s32 %s37, %s36
          %s481 = smul.addr %s480, 8
          %s482 = scalar_lea.hbm %s4, %s481
          %s484 = sshll.u32 %s469, 4
          %s485 = int_to_ptr.vmem [resolvable:$true] %s484
          %s486 = sshll.u32 %s482, 4
          %s487 = int_to_ptr.hbm [resolvable:$true] %s486
          %489 = dma.vmem_to_hbm [thread:$0]  %s485, 128, %s487, %s466
        $region56: #{tpu_custom_call.1} parent=35 // pred_fallthru
          _
        // Predicated region
        $region57: #{tpu_custom_call.1} parent=35 // pred_check
          %p490 = pneg %p200
        $region58: #{tpu_custom_call.1} parent=35 // pred_check_branch
          %492 = sbr.rel (%p490) target = $region60
        $region59: #{tpu_custom_call.1} parent=35 // pred_region
          %494 = vsyncadd %s471, 0
          %s495 = sadd.s32 %s37, %s36
          %s496 = smul.addr %s495, 8
          %s497 = scalar_lea.hbm %s5, %s496
          %s499 = sshll.u32 %s474, 4
          %s500 = int_to_ptr.vmem [resolvable:$true] %s499
          %s501 = sshll.u32 %s497, 4
          %s502 = int_to_ptr.hbm [resolvable:$true] %s501
          %504 = dma.vmem_to_hbm [thread:$0]  %s500, 128, %s502, %s471
        $region60: #{tpu_custom_call.1} parent=35 // pred_fallthru
          _
      $region36: #{tpu_custom_call.1} parent=5 // pred_fallthru
        _
      %p505 = scmp.le.s32.totalorder 2, %s27
      // Predicated region
      $region61: #{tpu_custom_call.1} parent=5 // pred_check
        %p506 = pneg %p505
      $region62: #{tpu_custom_call.1} parent=5 // pred_check_branch
        %508 = sbr.rel (%p506) target = $region64
      $region63: #{tpu_custom_call.1} parent=5 // pred_region
        %s509 = ssub.s32 %s27, 2
        // Predicated region
        $region65: #{tpu_custom_call.1} parent=63 // pred_check
          %p510 = pneg %p178
        $region66: #{tpu_custom_call.1} parent=63 // pred_check_branch
          %512 = sbr.rel (%p510) target = $region68
        $region67: #{tpu_custom_call.1} parent=63 // pred_region
          %s513 = sand.u32 %s163, 1
          %s514 = scalar_lea.sflag [#allocation4], %s513
          %s515 = sand.u32 %s163, 1
          %s516 = smul.addr %s515, 8
          %s517 = scalar_lea.vmem [#allocation10], %s516
          %519 = dma.done %s514, 128
        $region68: #{tpu_custom_call.1} parent=63 // pred_fallthru
          _
        // Predicated region
        $region69: #{tpu_custom_call.1} parent=63 // pred_check
          %p520 = pneg %p206
        $region70: #{tpu_custom_call.1} parent=63 // pred_check_branch
          %522 = sbr.rel (%p520) target = $region72
        $region71: #{tpu_custom_call.1} parent=63 // pred_region
          %s523 = sand.u32 %s191, 1
          %s524 = scalar_lea.sflag [#allocation12], %s523
          %s525 = sand.u32 %s191, 1
          %s526 = smul.addr %s525, 8
          %s527 = scalar_lea.vmem [#allocation11], %s526
          %529 = dma.done %s524, 128
        $region72: #{tpu_custom_call.1} parent=63 // pred_fallthru
          _
      $region64: #{tpu_custom_call.1} parent=5 // pred_fallthru
        _
    $region6: #{tpu_custom_call.1} parent=1 // loop_footer
      %s31 = sadd.s32 1, %s27
    $region7: #{tpu_custom_call.1} parent=1 // loop_footer_branch
      %26 = sbr.rel target = $region3
    $region8: #{tpu_custom_call.1} parent=1 // loop_exit
      _
    %530 = vsyncpa [#allocation3], 1
    %s531 = scalar_lea.sflag [#allocation3], 1
    %532 = vsyncpa %s531, 1
    %533 = vsyncpa [#allocation6], 1
    %s534 = scalar_lea.sflag [#allocation6], 1
    %535 = vsyncpa %s534, 1
    %536 = vsyncpa [#allocation9], 1
    %s537 = scalar_lea.sflag [#allocation9], 1
    %538 = vsyncpa %s537, 1
    %539 = vsyncpa [#allocation4], 1
    %s540 = scalar_lea.sflag [#allocation4], 1
    %541 = vsyncpa %s540, 1
    %542 = vsyncpa [#allocation12], 1
    %s543 = scalar_lea.sflag [#allocation12], 1
    %544 = vsyncpa %s543, 1

</llo_original>
